<compile_context>
chip_gen: v7x
topology: tpu7x:2x2x1
jax: 0.10.0
libtpu: 0.0.40
codegen_flags: <defaults>
</compile_context>

<pallas_src>
import jax
import jax.numpy as jnp
from jax.experimental import pallas as pl
from jax.experimental.pallas import tpu as pltpu


# ----- packed parameter slab layout: (136 rows x 128 lanes) f32 -------------
_P_ROWS = 136
_P_COLS = 128
_W1_ROWS = (0, 64)     # fused stage-1 weight  (64, 128)
_B1_ROW = 64           # fused stage-1 bias    (1, 128)
_B2_ROW = 65           # fused stage-2 bias    (1, 128)
_W2_ROWS = (72, 136)   # fused stage-2 weight  (64, 128)

# fused per-stage output column layout (within the 128-lane matmul result)
_DEC_COLS = (0, 64)    # dec_pre  (ReLU applied in-kernel)
_ENC_COLS = (64, 72)   # enc
_BOT_COLS = (72, 74)   # bot
_SMALL_W = 32          # small-output slab width: enc1|bot1|enc2|bot2|pad(12)


def dae_kernel(x_ref, p_ref, out_dec_ref, out_small_ref):
    x = x_ref[...]                                  # (tile, 64)

    w1 = p_ref[_W1_ROWS[0]:_W1_ROWS[1], :]          # (64, 128)
    b1 = p_ref[_B1_ROW:_B1_ROW + 1, :]              # (1, 128)
    w2 = p_ref[_W2_ROWS[0]:_W2_ROWS[1], :]          # (64, 128)
    b2 = p_ref[_B2_ROW:_B2_ROW + 1, :]              # (1, 128)

    # Stage 1: [dec1_pre | enc1 | bot1 | pad] = x @ W1 + B1   (one MXU push)
    y1 = jnp.dot(x, w1, preferred_element_type=jnp.float32) + b1
    dec1 = jnp.maximum(y1[:, _DEC_COLS[0]:_DEC_COLS[1]], 0.0)   # (tile, 64)

    # Stage 2: [dec2_pre | enc2 | bot2 | pad] = dec1 @ W2 + B2 (one MXU push)
    y2 = jnp.dot(dec1, w2, preferred_element_type=jnp.float32) + b2
    dec2 = jnp.maximum(y2[:, _DEC_COLS[0]:_DEC_COLS[1]], 0.0)   # (tile, 64)

    # Compose packed rows in registers -> single full-width stores.
    out_dec_ref[...] = jnp.concatenate([dec1, dec2], axis=1).astype(
        out_dec_ref.dtype)                                      # (tile, 128)
    pad = jnp.zeros((x.shape[0], _SMALL_W - 20), jnp.float32)
    small = jnp.concatenate(
        [y1[:, _ENC_COLS[0]:_BOT_COLS[1]],   # enc1 | bot1  (10 lanes)
         y2[:, _ENC_COLS[0]:_BOT_COLS[1]],   # enc2 | bot2  (10 lanes)
         pad], axis=1)                       # zero pad     (12 lanes)
    out_small_ref[...] = small.astype(out_small_ref.dtype)      # (tile, 32)


def init_params(key):
    """Deterministic nn.Linear-style init (uniform(-1/sqrt(fan_in), 1/sqrt(fan_in)))."""
    dims = [
        ("enc1", 64, 8),
        ("bot1", 8, 2),
        ("dec1a", 2, 8),
        ("dec1b", 8, 64),
        ("enc2", 64, 8),
        ("bot2", 8, 2),
        ("dec2a", 2, 8),
        ("dec2b", 8, 64),
    ]
    params = {}
    keys = jax.random.split(key, 2 * len(dims))
    for i, (name, fan_in, fan_out) in enumerate(dims):
        bound = 1.0 / (fan_in ** 0.5)
        # W stored as (in, out)  (i.e. PyTorch weight (out, in) transposed)
        w = jax.random.uniform(keys[2 * i], (fan_in, fan_out),
                               jnp.float32, -bound, bound)
        b = jax.random.uniform(keys[2 * i + 1], (1, fan_out),
                               jnp.float32, -bound, bound)
        params[name] = (w, b)
    return params


def _fuse_stage(we, be, wb, bb, wda, bda, wdb, bdb):
    """Fuse encoder -> bottleneck -> decoder(Linear,Linear) into one (64,128) block.

    No nonlinearity between the layers, so:
        enc      = a @ We + be
        bot      = a @ (We Wb) + (be Wb + bb)
        dec_pre  = a @ (We Wb Wd) + ((be Wb + bb) Wd + bd)
    where Wd = Wda Wdb, bd = bda Wdb + bdb.
    """
    wd = wda @ wdb                  # (2, 64)
    bd = bda @ wdb + bdb            # (1, 64)
    w_eb = we @ wb                  # (64, 2)
    b_eb = be @ wb + bb             # (1, 2)
    w_ed = w_eb @ wd                # (64, 64)
    b_ed = b_eb @ wd + bd           # (1, 64)

    w = jnp.zeros((64, _P_COLS), jnp.float32)
    b = jnp.zeros((1, _P_COLS), jnp.float32)
    w = w.at[:, _DEC_COLS[0]:_DEC_COLS[1]].set(w_ed)
    w = w.at[:, _ENC_COLS[0]:_ENC_COLS[1]].set(we)
    w = w.at[:, _BOT_COLS[0]:_BOT_COLS[1]].set(w_eb)
    b = b.at[:, _DEC_COLS[0]:_DEC_COLS[1]].set(b_ed)
    b = b.at[:, _ENC_COLS[0]:_ENC_COLS[1]].set(be)
    b = b.at[:, _BOT_COLS[0]:_BOT_COLS[1]].set(b_eb)
    return w, b


def pack_params(params):
    """Fuse each stage and pack everything into one (136, 128) f32 slab."""
    w1, b1 = _fuse_stage(*params["enc1"], *params["bot1"],
                         *params["dec1a"], *params["dec1b"])
    w2, b2 = _fuse_stage(*params["enc2"], *params["bot2"],
                         *params["dec2a"], *params["dec2b"])

    slab = jnp.zeros((_P_ROWS, _P_COLS), jnp.float32)
    slab = slab.at[_W1_ROWS[0]:_W1_ROWS[1], :].set(w1)
    slab = slab.at[_B1_ROW:_B1_ROW + 1, :].set(b1)
    slab = slab.at[_B2_ROW:_B2_ROW + 1, :].set(b2)
    slab = slab.at[_W2_ROWS[0]:_W2_ROWS[1], :].set(w2)
    return slab


def deep_autoencoder_forward(x, params, *, batch_tile=2048):
    B, F = x.shape
    assert F == 64, "deep_autoencoder expects 64 input features"
    x = x.astype(jnp.float32)

    # Tile: multiple of 8, at most the (8-rounded) batch, default up to 2048.
    # (On v7x, keep batch_tile <= b_pad//2 for large B so both TensorCores get
    #  grid steps; at the default this already holds for B >= 4096.)
    bt = max(8, (int(batch_tile) // 8) * 8)
    tile = min(bt, ((B + 7) // 8) * 8)
    b_pad = pl.cdiv(B, tile) * tile
    if b_pad != B:
        x = jnp.pad(x, ((0, b_pad - B), (0, 0)))

    slab = pack_params(params)
    grid = (b_pad // tile,)

    fn = pl.pallas_call(
        dae_kernel,
        out_shape=(
            jax.ShapeDtypeStruct((b_pad, 128), jnp.float32),       # dec1|dec2
            jax.ShapeDtypeStruct((b_pad, _SMALL_W), jnp.float32),  # enc/bot
        ),
        grid_spec=pltpu.PrefetchScalarGridSpec(
            num_scalar_prefetch=0,
            grid=grid,
            in_specs=[
                pl.BlockSpec((tile, 64), lambda i: (i, 0)),            # x tile
                pl.BlockSpec((_P_ROWS, _P_COLS), lambda i: (0, 0)),    # params
            ],
            out_specs=[
                pl.BlockSpec((tile, 128), lambda i: (i, 0)),
                pl.BlockSpec((tile, _SMALL_W), lambda i: (i, 0)),
            ],
        ),
        compiler_params=pltpu.CompilerParams(
            dimension_semantics=("parallel",),
        ),
    )
    dec_out, small_out = fn(x, slab)

    enc1 = small_out[:B, 0:8]
    bot1 = small_out[:B, 8:10]
    enc2 = small_out[:B, 10:18]
    bot2 = small_out[:B, 18:20]
    dec1 = dec_out[:B, 0:64]
    dec2 = dec_out[:B, 64:128]
    return enc1, bot1, dec1, enc2, bot2, dec2


def reference_forward(x, params):
    """Pure-JAX reference matching the original (unfused) PyTorch module."""
    def linear(a, wb):
        w, b = wb
        return a @ w + b

    enc1 = linear(x, params["enc1"])
    bot1 = linear(enc1, params["bot1"])
    dec1 = jnp.maximum(linear(linear(bot1, params["dec1a"]), params["dec1b"]), 0.0)
    enc2 = linear(dec1, params["enc2"])
    bot2 = linear(enc2, params["bot2"])
    dec2 = jnp.maximum(linear(linear(bot2, params["dec2a"]), params["dec2b"]), 0.0)
    return enc1, bot1, dec1, enc2, bot2, dec2


if __name__ == "__main__":
    key = jax.random.PRNGKey(0)
    pkey, xkey = jax.random.split(key)

    params = init_params(pkey)

    B = 64  # small batch; feature count fixed at 64 by the module
    # module applies MinMaxScaler upstream -> inputs assumed in [0, 1]
    x = jax.random.uniform(xkey, (B, 64), jnp.float32, 0.0, 1.0)

    outs = deep_autoencoder_forward(x, params)
    outs = jax.block_until_ready(outs)

    refs = reference_forward(x, params)
    for o, r in zip(outs, refs):
        assert o.shape == r.shape and o.dtype == r.dtype
        # stage fusion only reorders FP accumulation of tiny sums
        assert jnp.max(jnp.abs(o - r)) < 1e-4

    print("KERNEL_OK")
</pallas_src>

<mosaic_0001>
module attributes {stable_mosaic.version = 11 : i64} {
  func.func @dae_kernel(%arg0: i32, %arg1: memref<64x64xf32, #tpu.memory_space<vmem>>, %arg2: memref<136x128xf32, #tpu.memory_space<vmem>>, %arg3: memref<64x128xf32, #tpu.memory_space<vmem>>, %arg4: memref<64x32xf32, #tpu.memory_space<vmem>>) attributes {dimension_semantics = [#tpu.dimension_semantics<parallel>], iteration_bounds = array<i64: 1>, scalar_prefetch = 0 : i64, scratch_operands = 0 : i64, tpu.core_type = #tpu.core_type<tc>, window_params = [{transform_indices = @transform_0, window_bounds = array<i64: 64, 64>}, {pipeline_mode = #tpu.pipeline_mode<synchronous>, transform_indices = @transform_1, window_bounds = array<i64: 136, 128>}, {transform_indices = @transform_2, window_bounds = array<i64: 64, 128>}, {transform_indices = @transform_3, window_bounds = array<i64: 64, 32>}]} {
    %c0 = arith.constant 0 : index
    %c0_0 = arith.constant 0 : index
    %0 = vector.load %arg1[%c0, %c0_0] : memref<64x64xf32, #tpu.memory_space<vmem>>, vector<64x64xf32>
    %c0_1 = arith.constant 0 : index
    %c0_2 = arith.constant 0 : index
    %1 = vector.load %arg2[%c0_1, %c0_2] : memref<136x128xf32, #tpu.memory_space<vmem>>, vector<64x128xf32>
    %c64 = arith.constant 64 : index
    %c0_3 = arith.constant 0 : index
    %2 = vector.load %arg2[%c64, %c0_3] : memref<136x128xf32, #tpu.memory_space<vmem>>, vector<1x128xf32>
    %c72 = arith.constant 72 : index
    %c0_4 = arith.constant 0 : index
    %3 = vector.load %arg2[%c72, %c0_4] : memref<136x128xf32, #tpu.memory_space<vmem>>, vector<64x128xf32>
    %c65 = arith.constant 65 : index
    %c0_5 = arith.constant 0 : index
    %4 = vector.load %arg2[%c65, %c0_5] : memref<136x128xf32, #tpu.memory_space<vmem>>, vector<1x128xf32>
    %cst = arith.constant dense<0.000000e+00> : vector<64x128xf32>
    %5 = tpu.matmul %0, %1, %cst {dimension_numbers = #tpu.dot_dimension_numbers<[1], [0], [0], [1], [0, 0, 1, 1], [], []>} : vector<64x64xf32>, vector<64x128xf32>, vector<64x128xf32> -> vector<64x128xf32>
    %6 = vector.broadcast %2 : vector<1x128xf32> to vector<64x128xf32>
    %7 = arith.addf %5, %6 : vector<64x128xf32>
    %8 = vector.extract_strided_slice %7 {offsets = [0, 0], sizes = [64, 64], strides = [1, 1]} : vector<64x128xf32> to vector<64x64xf32>
    %cst_6 = arith.constant 0.000000e+00 : f32
    %9 = vector.broadcast %cst_6 : f32 to vector<64x64xf32>
    %10 = arith.maximumf %8, %9 : vector<64x64xf32>
    %cst_7 = arith.constant dense<0.000000e+00> : vector<64x128xf32>
    %11 = tpu.matmul %10, %3, %cst_7 {dimension_numbers = #tpu.dot_dimension_numbers<[1], [0], [0], [1], [0, 0, 1, 1], [], []>} : vector<64x64xf32>, vector<64x128xf32>, vector<64x128xf32> -> vector<64x128xf32>
    %12 = vector.broadcast %4 : vector<1x128xf32> to vector<64x128xf32>
    %13 = arith.addf %11, %12 : vector<64x128xf32>
    %14 = vector.extract_strided_slice %13 {offsets = [0, 0], sizes = [64, 64], strides = [1, 1]} : vector<64x128xf32> to vector<64x64xf32>
    %cst_8 = arith.constant 0.000000e+00 : f32
    %15 = vector.broadcast %cst_8 : f32 to vector<64x64xf32>
    %16 = arith.maximumf %14, %15 : vector<64x64xf32>
    %17 = tpu.concatenate %10, %16 in 1 : vector<64x64xf32>, vector<64x64xf32> -> vector<64x128xf32>
    %c0_9 = arith.constant 0 : index
    %c0_10 = arith.constant 0 : index
    %18 = vector.load %arg3[%c0_9, %c0_10] : memref<64x128xf32, #tpu.memory_space<vmem>>, vector<64x128xf32>
    tpu.vector_store %arg3[%c0_9, %c0_10], %17 {strides = array<i32>} : memref<64x128xf32, #tpu.memory_space<vmem>>, vector<64x128xf32>,
    %cst_11 = arith.constant 0.000000e+00 : f32
    %19 = vector.broadcast %cst_11 : f32 to vector<64x12xf32>
    %20 = vector.extract_strided_slice %7 {offsets = [0, 64], sizes = [64, 10], strides = [1, 1]} : vector<64x128xf32> to vector<64x10xf32>
    %21 = vector.extract_strided_slice %13 {offsets = [0, 64], sizes = [64, 10], strides = [1, 1]} : vector<64x128xf32> to vector<64x10xf32>
    %22 = tpu.concatenate %20, %21, %19 in 1 : vector<64x10xf32>, vector<64x10xf32>, vector<64x12xf32> -> vector<64x32xf32>
    %c0_12 = arith.constant 0 : index
    %c0_13 = arith.constant 0 : index
    %23 = vector.load %arg4[%c0_12, %c0_13] : memref<64x32xf32, #tpu.memory_space<vmem>>, vector<64x32xf32>
    tpu.vector_store %arg4[%c0_12, %c0_13], %22 {strides = array<i32>} : memref<64x32xf32, #tpu.memory_space<vmem>>, vector<64x32xf32>,
    return
  }
  func.func @transform_0(%arg0: i32) -> (i32, i32) {
    %c0_i32 = arith.constant 0 : i32
    %c0_i32_0 = arith.constant 0 : i32
    return %arg0, %c0_i32 : i32, i32
  }
  func.func @transform_1(%arg0: i32) -> (i32, i32) {
    %c0_i32 = arith.constant 0 : i32
    %c0_i32_0 = arith.constant 0 : i32
    %c0_i32_1 = arith.constant 0 : i32
    return %c0_i32, %c0_i32_0 : i32, i32
  }
  func.func @transform_2(%arg0: i32) -> (i32, i32) {
    %c0_i32 = arith.constant 0 : i32
    %c0_i32_0 = arith.constant 0 : i32
    return %arg0, %c0_i32 : i32, i32
  }
  func.func @transform_3(%arg0: i32) -> (i32, i32) {
    %c0_i32 = arith.constant 0 : i32
    %c0_i32_0 = arith.constant 0 : i32
    return %arg0, %c0_i32 : i32, i32
  }
}

</mosaic_0001>

<llo_original>
// kernel: tpu_custom_call.1
$region0: #{tpu_custom_call.1}
  #allocation0 [shape = 'u32[]', space=smem, size = 0x4, offset = 0x4, fixed_abs, tag = 'smem constant byte address 0x4 - core index']
  #allocation1 [shape = 'u32[144,128]{1,0:T(1,128)}', space=vmem, size = 0x12000, scoped, tag = 'internal scratch']
  %s0 = inlined_call_operand.hbm [shape: f32[64,64], index: 0, kind: input, shape index: {}]
  %s1 = inlined_call_operand.hbm [shape: f32[136,128], index: 1, kind: input, shape index: {}]
  %s2 = inlined_call_operand.hbm [shape: f32[64,128], index: 2, kind: output, shape index: {0}]
  %s3 = inlined_call_operand.vmem [shape: f32[64,32], index: 3, kind: output, shape index: {1}]
  %4 = xla_tuple %s2, %s3
  %s5 = sld [smem:[#allocation0]]
  $region34: #{tpu_custom_call.1} parent=0
    _
  %s7 = ssub.s32 1, %s5
  %s8 = scalar_select 0, %s7, %s5
  $region1: #{tpu_custom_call.1} parent=0
    #allocation2 [shape = 'u8[32768]{0}', space=vmem, size = 0x8000, scoped, tag = 'input window, operand 0, single buffered']
    #allocation3 [shape = 's32[1]{0}', space=sflag, size = 0x4, scoped, tag = 'scoped memory for tpu_custom_call.1']
    #allocation4 [shape = 's32[1]{0}', space=sflag, size = 0x4, scoped, tag = 'scoped memory for tpu_custom_call.1']
    #allocation5 [shape = 'u8[69632]{0}', space=vmem, size = 0x11000, scoped, tag = 'input window, operand 1, single buffered']
    #allocation6 [shape = 's32[1]{0}', space=sflag, size = 0x4, scoped, tag = 'scoped memory for tpu_custom_call.1']
    #allocation7 [shape = 'u8[32768]{0}', space=vmem, size = 0x8000, scoped, tag = 'output window, operand 0, single buffered']
    %9 = vsyncpa [#allocation3], 0
    %10 = vsyncpa [#allocation6], 0
    %11 = vsyncpa [#allocation4], 0
    // Predicated region
    $region2: #{tpu_custom_call.1} parent=1 // pred_check
      _
    $region3: #{tpu_custom_call.1} parent=1 // pred_check_branch
      %13 = sbr.rel (0) target = $region5
    $region4: #{tpu_custom_call.1} parent=1 // pred_region
      %s15 = ssub.s32 1024, 1024
      %16 = vsyncadd [#allocation3], %s15
      %s17 = sshll.u32 [#allocation2], 4
      %s18 = int_to_ptr.vmem [resolvable:$true] %s17
      %23 = dma.hbm_to_vmem [thread:$0]  %s0, 1024, %s18, [#allocation3], 128, 128, 8
    $region5: #{tpu_custom_call.1} parent=1 // pred_fallthru
      _
    // Predicated region
    $region6: #{tpu_custom_call.1} parent=1 // pred_check
      _
    $region7: #{tpu_custom_call.1} parent=1 // pred_check_branch
      %25 = sbr.rel (0) target = $region9
    $region8: #{tpu_custom_call.1} parent=1 // pred_region
      %s27 = ssub.s32 2176, 2176
      %28 = vsyncadd [#allocation6], %s27
      %s29 = sshll.u32 [#allocation5], 4
      %s30 = int_to_ptr.vmem [resolvable:$true] %s29
      %35 = dma.hbm_to_vmem [thread:$0]  %s1, 2176, %s30, [#allocation6], 128, 128, 8
    $region9: #{tpu_custom_call.1} parent=1 // pred_fallthru
      _
    // Predicated region
    $region10: #{tpu_custom_call.1} parent=1 // pred_check
      _
    $region11: #{tpu_custom_call.1} parent=1 // pred_check_branch
      %37 = sbr.rel (0) target = $region13
    $region12: #{tpu_custom_call.1} parent=1 // pred_region
      %38 = dma.done [#allocation3], 1024
    $region13: #{tpu_custom_call.1} parent=1 // pred_fallthru
      _
    // Predicated region
    $region14: #{tpu_custom_call.1} parent=1 // pred_check
      _
    $region15: #{tpu_custom_call.1} parent=1 // pred_check_branch
      %40 = sbr.rel (0) target = $region17
    $region16: #{tpu_custom_call.1} parent=1 // pred_region
      %41 = dma.done [#allocation6], 2176
    $region17: #{tpu_custom_call.1} parent=1 // pred_fallthru
      _
    %v42 = vld [vmem:[#allocation2] sm:$0xff]
    %v43 = vld [vmem:[#allocation2 + $0x8] sm:$0xff]
    %v44 = vld [vmem:[#allocation2 + $0x10] sm:$0xff]
    %v45 = vld [vmem:[#allocation2 + $0x18] sm:$0xff]
    %v46 = vld [vmem:[#allocation2 + $0x20] sm:$0xff]
    %v47 = vld [vmem:[#allocation2 + $0x28] sm:$0xff]
    %v48 = vld [vmem:[#allocation2 + $0x30] sm:$0xff]
    %v49 = vld [vmem:[#allocation2 + $0x38] sm:$0xff]
    %v50 = vld [vmem:[#allocation5] sm:$0xff]
    %v51 = vld [vmem:[#allocation5 + $0x8] sm:$0xff]
    %v52 = vld [vmem:[#allocation5 + $0x10] sm:$0xff]
    %v53 = vld [vmem:[#allocation5 + $0x18] sm:$0xff]
    %v54 = vld [vmem:[#allocation5 + $0x20] sm:$0xff]
    %v55 = vld [vmem:[#allocation5 + $0x28] sm:$0xff]
    %v56 = vld [vmem:[#allocation5 + $0x30] sm:$0xff]
    %v57 = vld [vmem:[#allocation5 + $0x38] sm:$0xff]
    %v58 = vld [vmem:[#allocation5 + $0x40] sm:$0x1]
    %v59 = vld [vmem:[#allocation5 + $0x48] sm:$0xff]
    %v60 = vld [vmem:[#allocation5 + $0x50] sm:$0xff]
    %v61 = vld [vmem:[#allocation5 + $0x58] sm:$0xff]
    %v62 = vld [vmem:[#allocation5 + $0x60] sm:$0xff]
    %v63 = vld [vmem:[#allocation5 + $0x68] sm:$0xff]
    %v64 = vld [vmem:[#allocation5 + $0x70] sm:$0xff]
    %v65 = vld [vmem:[#allocation5 + $0x78] sm:$0xff]
    %v66 = vld [vmem:[#allocation5 + $0x80] sm:$0xff]
    %v67 = vld [vmem:[#allocation5 + $0x41] sm:$0x1]
    %v68 = vlaneseq
    %v69 = vshrl.u32 %v68, 7
    %v70 = vsub.s32 0, %v69
    %v71 = vrot.slane %v58, %v70
    %vm72 = vcmask 523264
    %v74 = vsel %vm72, %v42, 0
    %v77 = vsel %vm72, %v43, 0
    %v80 = vsel %vm72, %v44, 0
    %v83 = vsel %vm72, %v45, 0
    %v86 = vsel %vm72, %v46, 0
    %v89 = vsel %vm72, %v47, 0
    %v92 = vsel %vm72, %v48, 0
    %v95 = vsel %vm72, %v49, 0
    %97 = vmatprep.subr.mxu0 0.0
    %98 = vmatpush1.msra.mxu0 %v50
    %99 = vmatprep.subr.mxu0 0.0
    %100 = vmatpush1.msra.mxu0 %v51
    %101 = vmatprep.subr.mxu0 0.0
    %102 = vmatpush1.msra.mxu0 %v52
    %103 = vmatprep.subr.mxu0 0.0
    %104 = vmatpush1.msra.mxu0 %v53
    %105 = vmatprep.subr.mxu0 0.0
    %106 = vmatpush1.msra.mxu0 %v54
    %107 = vmatprep.subr.mxu0 0.0
    %108 = vmatpush1.msra.mxu0 %v55
    %109 = vmatprep.subr.mxu0 0.0
    %110 = vmatpush1.msra.mxu0 %v56
    %111 = vmatprep.subr.mxu0 0.0
    %112 = vmatpush1.msra.mxu0 %v57
    %113 = vmatprep.subr.mxu0 0.0
    %114 = vmatpush1.msra.mxu0 0.0
    %115 = vmatprep.subr.mxu0 0.0
    %116 = vmatpush1.msra.mxu0 0.0
    %117 = vmatprep.subr.mxu0 0.0
    %118 = vmatpush1.msra.mxu0 0.0
    %119 = vmatprep.subr.mxu0 0.0
    %120 = vmatpush1.msra.mxu0 0.0
    %121 = vmatprep.subr.mxu0 0.0
    %122 = vmatpush1.msra.mxu0 0.0
    %123 = vmatprep.subr.mxu0 0.0
    %124 = vmatpush1.msra.mxu0 0.0
    %125 = vmatprep.subr.mxu0 0.0
    %126 = vmatpush1.msra.mxu0 0.0
    %127 = vmatprep.subr.mxu0 0.0
    %128 = vmatpush1.msra.mxu0 0.0
    %129 = vmatprep.subr.mxu0 0.0
    %130 = vmatpush1.msra.mxu0 0.0
    %131 = vmatprep.subr.mxu0 0.0
    %132 = vmatpush1.msra.mxu0 0.0
    %133 = vmatprep.subr.mxu0 0.0
    %134 = vmatpush1.msra.mxu0 0.0
    %135 = vmatprep.subr.mxu0 0.0
    %136 = vmatpush1.msra.mxu0 0.0
    %137 = vmatprep.subr.mxu0 0.0
    %138 = vmatpush1.msra.mxu0 0.0
    %139 = vmatprep.subr.mxu0 0.0
    %140 = vmatpush1.msra.mxu0 0.0
    %141 = vmatprep.subr.mxu0 0.0
    %142 = vmatpush1.msra.mxu0 0.0
    %143 = vmatprep.subr.mxu0 0.0
    %144 = vmatpush1.msra.mxu0 0.0
    %145 = vmatprep.subr.mxu0 0.0
    %146 = vmatpush1.msra.mxu0 0.0
    %147 = vmatprep.subr.mxu0 0.0
    %148 = vmatpush1.msra.mxu0 0.0
    %149 = vmatprep.subr.mxu0 0.0
    %150 = vmatpush1.msra.mxu0 0.0
    %151 = vmatprep.subr.mxu0 0.0
    %152 = vmatpush1.msra.mxu0 0.0
    %153 = vmatprep.subr.mxu0 0.0
    %154 = vmatpush1.msra.mxu0 0.0
    %155 = vmatprep.subr.mxu0 0.0
    %156 = vmatpush1.msra.mxu0 0.0
    %157 = vmatprep.subr.mxu0 0.0
    %158 = vmatpush1.msra.mxu0 0.0
    %159 = vmatprep.subr.mxu0 0.0
    %160 = vmatpush1.msra.mxu0 0.0
    %161 = vmatprep.mubr.f32.mxu0 0.0
    %162 = vmatmul.mubr.f32.gmra.mrb[0].mxu0 %v74
    %v163 = vpop.f32.mrb[0].mxu0
    %v164 = vadd.f32 %v71, %v163
    %v165 = vpop.f32.mrb[0].mxu0
    %166 = vmatprep.mubr.f32.mxu0 0.0
    %167 = vmatmul.mubr.f32.gmra.mrb[0].mxu0 %v77
    %v168 = vpop.f32.mrb[0].mxu0
    %v169 = vadd.f32 %v71, %v168
    %v170 = vpop.f32.mrb[0].mxu0
    %171 = vmatprep.mubr.f32.mxu0 0.0
    %172 = vmatmul.mubr.f32.gmra.mrb[0].mxu0 %v80
    %v173 = vpop.f32.mrb[0].mxu0
    %v174 = vadd.f32 %v71, %v173
    %v175 = vpop.f32.mrb[0].mxu0
    %176 = vmatprep.mubr.f32.mxu0 0.0
    %177 = vmatmul.mubr.f32.gmra.mrb[0].mxu0 %v83
    %v178 = vpop.f32.mrb[0].mxu0
    %v179 = vadd.f32 %v71, %v178
    %v180 = vpop.f32.mrb[0].mxu0
    %181 = vmatprep.mubr.f32.mxu0 0.0
    %182 = vmatmul.mubr.f32.gmra.mrb[0].mxu0 %v86
    %v183 = vpop.f32.mrb[0].mxu0
    %v184 = vadd.f32 %v71, %v183
    %v185 = vpop.f32.mrb[0].mxu0
    %186 = vmatprep.mubr.f32.mxu0 0.0
    %187 = vmatmul.mubr.f32.gmra.mrb[0].mxu0 %v89
    %v188 = vpop.f32.mrb[0].mxu0
    %v189 = vadd.f32 %v71, %v188
    %v190 = vpop.f32.mrb[0].mxu0
    %191 = vmatprep.mubr.f32.mxu0 0.0
    %192 = vmatmul.mubr.f32.gmra.mrb[0].mxu0 %v92
    %v193 = vpop.f32.mrb[0].mxu0
    %v194 = vadd.f32 %v71, %v193
    %v195 = vpop.f32.mrb[0].mxu0
    %196 = vmatprep.mubr.f32.mxu0 0.0
    %197 = vmatmul.mubr.f32.gmra.mrb[0].mxu0 %v95
    %v198 = vpop.f32.mrb[0].mxu0
    %v199 = vadd.f32 %v71, %v198
    %v200 = vpop.f32.mrb[0].mxu0
    %201 = vdwg.mxu0
    %v202 = vmax.f32 %v164, 0.0
    %v203 = vmax.f32 %v169, 0.0
    %v204 = vmax.f32 %v174, 0.0
    %v205 = vmax.f32 %v179, 0.0
    %v206 = vmax.f32 %v184, 0.0
    %v207 = vmax.f32 %v189, 0.0
    %v208 = vmax.f32 %v194, 0.0
    %v209 = vmax.f32 %v199, 0.0
    %v210 = vlaneseq
    %v211 = vshrl.u32 %v210, 7
    %v212 = vsub.s32 0, %v211
    %v213 = vrot.slane %v67, %v212
    %v215 = vsel %vm72, %v202, 0
    %v218 = vsel %vm72, %v203, 0
    %v221 = vsel %vm72, %v204, 0
    %v224 = vsel %vm72, %v205, 0
    %v227 = vsel %vm72, %v206, 0
    %v230 = vsel %vm72, %v207, 0
    %v233 = vsel %vm72, %v208, 0
    %v236 = vsel %vm72, %v209, 0
    %238 = vmatprep.subr.mxu0 0.0
    %239 = vmatpush1.msra.mxu0 %v59
    %240 = vmatprep.subr.mxu0 0.0
    %241 = vmatpush1.msra.mxu0 %v60
    %242 = vmatprep.subr.mxu0 0.0
    %243 = vmatpush1.msra.mxu0 %v61
    %244 = vmatprep.subr.mxu0 0.0
    %245 = vmatpush1.msra.mxu0 %v62
    %246 = vmatprep.subr.mxu0 0.0
    %247 = vmatpush1.msra.mxu0 %v63
    %248 = vmatprep.subr.mxu0 0.0
    %249 = vmatpush1.msra.mxu0 %v64
    %250 = vmatprep.subr.mxu0 0.0
    %251 = vmatpush1.msra.mxu0 %v65
    %252 = vmatprep.subr.mxu0 0.0
    %253 = vmatpush1.msra.mxu0 %v66
    %254 = vmatprep.subr.mxu0 0.0
    %255 = vmatpush1.msra.mxu0 0.0
    %256 = vmatprep.subr.mxu0 0.0
    %257 = vmatpush1.msra.mxu0 0.0
    %258 = vmatprep.subr.mxu0 0.0
    %259 = vmatpush1.msra.mxu0 0.0
    %260 = vmatprep.subr.mxu0 0.0
    %261 = vmatpush1.msra.mxu0 0.0
    %262 = vmatprep.subr.mxu0 0.0
    %263 = vmatpush1.msra.mxu0 0.0
    %264 = vmatprep.subr.mxu0 0.0
    %265 = vmatpush1.msra.mxu0 0.0
    %266 = vmatprep.subr.mxu0 0.0
    %267 = vmatpush1.msra.mxu0 0.0
    %268 = vmatprep.subr.mxu0 0.0
    %269 = vmatpush1.msra.mxu0 0.0
    %270 = vmatprep.subr.mxu0 0.0
    %271 = vmatpush1.msra.mxu0 0.0
    %272 = vmatprep.subr.mxu0 0.0
    %273 = vmatpush1.msra.mxu0 0.0
    %274 = vmatprep.subr.mxu0 0.0
    %275 = vmatpush1.msra.mxu0 0.0
    %276 = vmatprep.subr.mxu0 0.0
    %277 = vmatpush1.msra.mxu0 0.0
    %278 = vmatprep.subr.mxu0 0.0
    %279 = vmatpush1.msra.mxu0 0.0
    %280 = vmatprep.subr.mxu0 0.0
    %281 = vmatpush1.msra.mxu0 0.0
    %282 = vmatprep.subr.mxu0 0.0
    %283 = vmatpush1.msra.mxu0 0.0
    %284 = vmatprep.subr.mxu0 0.0
    %285 = vmatpush1.msra.mxu0 0.0
    %286 = vmatprep.subr.mxu0 0.0
    %287 = vmatpush1.msra.mxu0 0.0
    %288 = vmatprep.subr.mxu0 0.0
    %289 = vmatpush1.msra.mxu0 0.0
    %290 = vmatprep.subr.mxu0 0.0
    %291 = vmatpush1.msra.mxu0 0.0
    %292 = vmatprep.subr.mxu0 0.0
    %293 = vmatpush1.msra.mxu0 0.0
    %294 = vmatprep.subr.mxu0 0.0
    %295 = vmatpush1.msra.mxu0 0.0
    %296 = vmatprep.subr.mxu0 0.0
    %297 = vmatpush1.msra.mxu0 0.0
    %298 = vmatprep.subr.mxu0 0.0
    %299 = vmatpush1.msra.mxu0 0.0
    %300 = vmatprep.subr.mxu0 0.0
    %301 = vmatpush1.msra.mxu0 0.0
    %302 = vmatprep.mubr.f32.mxu0 0.0
    %303 = vmatmul.mubr.f32.gmra.mrb[0].mxu0 %v215
    %v304 = vpop.f32.mrb[0].mxu0
    %v305 = vadd.f32 %v213, %v304
    %v306 = vpop.f32.mrb[0].mxu0
    %307 = vmatprep.mubr.f32.mxu0 0.0
    %308 = vmatmul.mubr.f32.gmra.mrb[0].mxu0 %v218
    %v309 = vpop.f32.mrb[0].mxu0
    %v310 = vadd.f32 %v213, %v309
    %v311 = vpop.f32.mrb[0].mxu0
    %312 = vmatprep.mubr.f32.mxu0 0.0
    %313 = vmatmul.mubr.f32.gmra.mrb[0].mxu0 %v221
    %v314 = vpop.f32.mrb[0].mxu0
    %v315 = vadd.f32 %v213, %v314
    %v316 = vpop.f32.mrb[0].mxu0
    %317 = vmatprep.mubr.f32.mxu0 0.0
    %318 = vmatmul.mubr.f32.gmra.mrb[0].mxu0 %v224
    %v319 = vpop.f32.mrb[0].mxu0
    %v320 = vadd.f32 %v213, %v319
    %v321 = vpop.f32.mrb[0].mxu0
    %322 = vmatprep.mubr.f32.mxu0 0.0
    %323 = vmatmul.mubr.f32.gmra.mrb[0].mxu0 %v227
    %v324 = vpop.f32.mrb[0].mxu0
    %v325 = vadd.f32 %v213, %v324
    %v326 = vpop.f32.mrb[0].mxu0
    %327 = vmatprep.mubr.f32.mxu0 0.0
    %328 = vmatmul.mubr.f32.gmra.mrb[0].mxu0 %v230
    %v329 = vpop.f32.mrb[0].mxu0
    %v330 = vadd.f32 %v213, %v329
    %v331 = vpop.f32.mrb[0].mxu0
    %332 = vmatprep.mubr.f32.mxu0 0.0
    %333 = vmatmul.mubr.f32.gmra.mrb[0].mxu0 %v233
    %v334 = vpop.f32.mrb[0].mxu0
    %v335 = vadd.f32 %v213, %v334
    %v336 = vpop.f32.mrb[0].mxu0
    %337 = vmatprep.mubr.f32.mxu0 0.0
    %338 = vmatmul.mubr.f32.gmra.mrb[0].mxu0 %v236
    %v339 = vpop.f32.mrb[0].mxu0
    %v340 = vadd.f32 %v213, %v339
    %v341 = vpop.f32.mrb[0].mxu0
    %342 = vdwg.mxu0
    %v343 = vmax.f32 %v305, 0.0
    %v344 = vmax.f32 %v310, 0.0
    %v345 = vmax.f32 %v315, 0.0
    %v346 = vmax.f32 %v320, 0.0
    %v347 = vmax.f32 %v325, 0.0
    %v348 = vmax.f32 %v330, 0.0
    %v349 = vmax.f32 %v335, 0.0
    %v350 = vmax.f32 %v340, 0.0
    %359 = vrot.lane.b32.xlu0 %v343, 64
    %v360 = vpop.permute.xlu0 %359
    %361 = vrot.lane.b32.xlu0 %v344, 64
    %v362 = vpop.permute.xlu0 %361
    %363 = vrot.lane.b32.xlu0 %v345, 64
    %v364 = vpop.permute.xlu0 %363
    %365 = vrot.lane.b32.xlu0 %v346, 64
    %v366 = vpop.permute.xlu0 %365
    %367 = vrot.lane.b32.xlu0 %v347, 64
    %v368 = vpop.permute.xlu0 %367
    %369 = vrot.lane.b32.xlu0 %v348, 64
    %v370 = vpop.permute.xlu0 %369
    %371 = vrot.lane.b32.xlu0 %v349, 64
    %v372 = vpop.permute.xlu0 %371
    %373 = vrot.lane.b32.xlu0 %v350, 64
    %v374 = vpop.permute.xlu0 %373
    %v383 = vsel %vm72, %v202, %v360
    %v384 = vsel %vm72, %v203, %v362
    %v385 = vsel %vm72, %v204, %v364
    %v386 = vsel %vm72, %v205, %v366
    %v387 = vsel %vm72, %v206, %v368
    %v388 = vsel %vm72, %v207, %v370
    %v389 = vsel %vm72, %v208, %v372
    %v390 = vsel %vm72, %v209, %v374
    %391 = vst [vmem:[#allocation7] sm:$0xff] %v383
    %392 = vst [vmem:[#allocation7 + $0x8] sm:$0xff] %v384
    %393 = vst [vmem:[#allocation7 + $0x10] sm:$0xff] %v385
    %394 = vst [vmem:[#allocation7 + $0x18] sm:$0xff] %v386
    %395 = vst [vmem:[#allocation7 + $0x20] sm:$0xff] %v387
    %396 = vst [vmem:[#allocation7 + $0x28] sm:$0xff] %v388
    %397 = vst [vmem:[#allocation7 + $0x30] sm:$0xff] %v389
    %398 = vst [vmem:[#allocation7 + $0x38] sm:$0xff] %v390
    %407 = vrot.lane.b32.xlu0 %v164, 64
    %v408 = vpop.permute.xlu0 %407
    %409 = vrot.lane.b32.xlu0 %v169, 64
    %v410 = vpop.permute.xlu0 %409
    %411 = vrot.lane.b32.xlu0 %v174, 64
    %v412 = vpop.permute.xlu0 %411
    %413 = vrot.lane.b32.xlu0 %v179, 64
    %v414 = vpop.permute.xlu0 %413
    %415 = vrot.lane.b32.xlu0 %v184, 64
    %v416 = vpop.permute.xlu0 %415
    %417 = vrot.lane.b32.xlu0 %v189, 64
    %v418 = vpop.permute.xlu0 %417
    %419 = vrot.lane.b32.xlu0 %v194, 64
    %v420 = vpop.permute.xlu0 %419
    %421 = vrot.lane.b32.xlu0 %v199, 64
    %v422 = vpop.permute.xlu0 %421
    %439 = vrot.lane.b32.xlu0 %v305, 74
    %v440 = vpop.permute.xlu0 %439
    %441 = vrot.lane.b32.xlu0 %v310, 74
    %v442 = vpop.permute.xlu0 %441
    %443 = vrot.lane.b32.xlu0 %v315, 74
    %v444 = vpop.permute.xlu0 %443
    %445 = vrot.lane.b32.xlu0 %v320, 74
    %v446 = vpop.permute.xlu0 %445
    %447 = vrot.lane.b32.xlu0 %v325, 74
    %v448 = vpop.permute.xlu0 %447
    %449 = vrot.lane.b32.xlu0 %v330, 74
    %v450 = vpop.permute.xlu0 %449
    %451 = vrot.lane.b32.xlu0 %v335, 74
    %v452 = vpop.permute.xlu0 %451
    %453 = vrot.lane.b32.xlu0 %v340, 74
    %v454 = vpop.permute.xlu0 %453
    %vm463 = vcmask 80896
    %v464 = vsel %vm463, %v408, %v440
    %v465 = vsel %vm463, %v410, %v442
    %v466 = vsel %vm463, %v412, %v444
    %v467 = vsel %vm463, %v414, %v446
    %v468 = vsel %vm463, %v416, %v448
    %v469 = vsel %vm463, %v418, %v450
    %v470 = vsel %vm463, %v420, %v452
    %v471 = vsel %vm463, %v422, %v454
    %vm472 = vcmask 162816
    %v473 = vsel %vm472, %v464, 0.0
    %v474 = vsel %vm472, %v465, 0.0
    %v475 = vsel %vm472, %v466, 0.0
    %v476 = vsel %vm472, %v467, 0.0
    %v477 = vsel %vm472, %v468, 0.0
    %v478 = vsel %vm472, %v469, 0.0
    %v479 = vsel %vm472, %v470, 0.0
    %v480 = vsel %vm472, %v471, 0.0
    %vm481 = vcmask 261120
    %482 = vst.msk [vmem:[%s3] sm:$0xff] %vm481, %v473
    %483 = vst.msk [vmem:[%s3 + $0x8] sm:$0xff] %vm481, %v474
    %484 = vst.msk [vmem:[%s3 + $0x10] sm:$0xff] %vm481, %v475
    %485 = vst.msk [vmem:[%s3 + $0x18] sm:$0xff] %vm481, %v476
    %486 = vst.msk [vmem:[%s3 + $0x20] sm:$0xff] %vm481, %v477
    %487 = vst.msk [vmem:[%s3 + $0x28] sm:$0xff] %vm481, %v478
    %488 = vst.msk [vmem:[%s3 + $0x30] sm:$0xff] %vm481, %v479
    %489 = vst.msk [vmem:[%s3 + $0x38] sm:$0xff] %vm481, %v480
    // Predicated region
    $region18: #{tpu_custom_call.1} parent=1 // pred_check
      _
    $region19: #{tpu_custom_call.1} parent=1 // pred_check_branch
      %491 = sbr.rel (0) target = $region21
    $region20: #{tpu_custom_call.1} parent=1 // pred_region
      %s493 = ssub.s32 1024, 1024
      %494 = vsyncadd [#allocation4], %s493
      %s495 = sshll.u32 [#allocation7], 4
      %s496 = int_to_ptr.vmem [resolvable:$true] %s495
      %501 = dma.vmem_to_hbm [thread:$0]  %s496, 1024, %s2, [#allocation4], 128, 128, 8
    $region21: #{tpu_custom_call.1} parent=1 // pred_fallthru
      _
    // Predicated region
    $region22: #{tpu_custom_call.1} parent=1 // pred_check
      _
    $region23: #{tpu_custom_call.1} parent=1 // pred_check_branch
      %503 = sbr.rel (0) target = $region25
    $region24: #{tpu_custom_call.1} parent=1 // pred_region
      _
    $region25: #{tpu_custom_call.1} parent=1 // pred_fallthru
      _
    // Predicated region
    $region26: #{tpu_custom_call.1} parent=1 // pred_check
      _
    $region27: #{tpu_custom_call.1} parent=1 // pred_check_branch
      %505 = sbr.rel (0) target = $region29
    $region28: #{tpu_custom_call.1} parent=1 // pred_region
      %506 = dma.done [#allocation4], 1024
    $region29: #{tpu_custom_call.1} parent=1 // pred_fallthru
      _
    // Predicated region
    $region30: #{tpu_custom_call.1} parent=1 // pred_check
      _
    $region31: #{tpu_custom_call.1} parent=1 // pred_check_branch
      %508 = sbr.rel (0) target = $region33
    $region32: #{tpu_custom_call.1} parent=1 // pred_region
      _
    $region33: #{tpu_custom_call.1} parent=1 // pred_fallthru
      _
    %509 = vsyncpa [#allocation3], 1
    %510 = vsyncpa [#allocation6], 1
    %511 = vsyncpa [#allocation4], 1

</llo_original>
